<compile_context>
chip_gen: v5e
topology: v5e:2x2
jax: 0.10.0
libtpu: 0.0.40
codegen_flags: <defaults>
</compile_context>

<pallas_src>
import functools

import jax
import jax.numpy as jnp
from jax import lax
from jax.experimental import pallas as pl
from jax.experimental.pallas import tpu as pltpu


def calayer_kernel(x_ref, w1_ref, b1_ref, w2_ref, b2_ref, o_ref, *, bt):
    # x_ref/o_ref: (bt, C, HW); w1: (Cmid, C); b1: (Cmid, 1); w2: (C, Cmid); b2: (C, 1)
    w1 = w1_ref[...]
    b1 = b1_ref[...]
    w2 = w2_ref[...]
    b2 = b2_ref[...]
    for b in range(bt):                       # static unroll; bt is small (<=4)
        x = x_ref[b]                          # (C, HW), channels on sublanes
        # Global average pool over spatial lanes -> (C, 1) column.
        pooled = jnp.mean(x, axis=-1, keepdims=True)
        # 1x1 conv (channel squeeze) + ReLU: (Cmid, C) @ (C, 1) -> (Cmid, 1).
        h = jnp.dot(w1, pooled, preferred_element_type=jnp.float32) + b1
        h = jnp.maximum(h, 0.0)
        # 1x1 conv (channel excite): (C, Cmid) @ (Cmid, 1) -> (C, 1).
        z = jnp.dot(w2, h, preferred_element_type=jnp.float32) + b2
        # Sigmoid = 1 / (1 + exp(-z)); exp + approx reciprocal both run on the EUP.
        scale = pl.reciprocal(1.0 + jnp.exp(-z), approx=True)        # (C, 1)
        # Channel-wise rescale: (C, 1) broadcast along the dense lane axis.
        o_ref[b] = (x * scale).astype(o_ref.dtype)


def _pick_batch_tile(batch, max_bt=4):
    for bt in range(min(batch, max_bt), 0, -1):
        if batch % bt == 0:
            return bt
    return 1


def calayer_forward(x, params):
    B, C, H, W = x.shape
    Cmid = params["w1"].shape[0]
    HW = H * W
    x2 = x.reshape(B, C, HW)

    bt = _pick_batch_tile(B)
    grid = (B // bt,)

    flops = 2 * B * C * HW + 4 * B * Cmid * C          # pool + rescale + matvecs
    transcendentals = B * C                            # exp in sigmoid
    bytes_accessed = 4 * (2 * B * C * HW + 2 * Cmid * C + Cmid + C)

    out = pl.pallas_call(
        functools.partial(calayer_kernel, bt=bt),
        out_shape=jax.ShapeDtypeStruct((B, C, HW), x.dtype),
        grid=grid,
        in_specs=[
            pl.BlockSpec((bt, C, HW), lambda i: (i, 0, 0)),   # x (batch tile)
            pl.BlockSpec((Cmid, C), lambda i: (0, 0)),        # w1
            pl.BlockSpec((Cmid, 1), lambda i: (0, 0)),        # b1
            pl.BlockSpec((C, Cmid), lambda i: (0, 0)),        # w2
            pl.BlockSpec((C, 1), lambda i: (0, 0)),           # b2
        ],
        out_specs=pl.BlockSpec((bt, C, HW), lambda i: (i, 0, 0)),
        compiler_params=pltpu.CompilerParams(
            dimension_semantics=("parallel",)),
        cost_estimate=pl.CostEstimate(
            flops=flops,
            transcendentals=transcendentals,
            bytes_accessed=bytes_accessed),
    )(x2, params["w1"], params["b1"], params["w2"], params["b2"])
    return out.reshape(B, C, H, W)


def calayer_ref(x, params):
    # Pure-JAX reference with the same semantics as the PyTorch CALayer.
    y = jnp.mean(x, axis=(2, 3), keepdims=True)                      # (B, C, 1, 1)
    y = jnp.einsum("mc,bcij->bmij", params["w1"], y,
                   precision=lax.Precision.HIGHEST) + params["b1"].reshape(1, -1, 1, 1)
    y = jnp.maximum(y, 0.0)
    y = jnp.einsum("cm,bmij->bcij", params["w2"], y,
                   precision=lax.Precision.HIGHEST) + params["b2"].reshape(1, -1, 1, 1)
    y = jax.nn.sigmoid(y)
    return x * y


if __name__ == "__main__":
    B, C, H, W = 2, 64, 16, 16
    reduction = 16
    Cmid = C // reduction

    key = jax.random.PRNGKey(0)
    k_x, k_w1, k_b1, k_w2, k_b2 = jax.random.split(key, 5)

    x = jax.random.normal(k_x, (B, C, H, W), jnp.float32)
    # Conv2d 1x1 weights stored as 2D matrices (out_ch, in_ch); biases as columns.
    params = {
        "w1": jax.random.normal(k_w1, (Cmid, C), jnp.float32) * (1.0 / C) ** 0.5,
        "b1": jax.random.normal(k_b1, (Cmid, 1), jnp.float32) * 0.1,
        "w2": jax.random.normal(k_w2, (C, Cmid), jnp.float32) * (1.0 / Cmid) ** 0.5,
        "b2": jax.random.normal(k_b2, (C, 1), jnp.float32) * 0.1,
    }

    y = calayer_forward(x, params)
    jax.block_until_ready(y)

    y_ref = calayer_ref(x, params)
    max_err = float(jnp.max(jnp.abs(y - y_ref)))
    assert jnp.allclose(y, y_ref, atol=1e-2, rtol=1e-2), f"max abs err {max_err}"

    print("KERNEL_OK")
</pallas_src>

<mosaic_0001>
module attributes {stable_mosaic.version = 11 : i64} {
  func.func @calayer_kernel(%arg0: i32, %arg1: memref<2x64x256xf32, #tpu.memory_space<vmem>>, %arg2: memref<4x64xf32, #tpu.memory_space<vmem>>, %arg3: memref<4x1xf32, #tpu.memory_space<vmem>>, %arg4: memref<64x4xf32, #tpu.memory_space<vmem>>, %arg5: memref<64x1xf32, #tpu.memory_space<vmem>>, %arg6: memref<2x64x256xf32, #tpu.memory_space<vmem>>) attributes {dimension_semantics = [#tpu.dimension_semantics<parallel>], iteration_bounds = array<i64: 1>, scalar_prefetch = 0 : i64, scratch_operands = 0 : i64, tpu.core_type = #tpu.core_type<tc>, window_params = [{transform_indices = @transform_0, window_bounds = array<i64: 2, 64, 256>}, {pipeline_mode = #tpu.pipeline_mode<synchronous>, transform_indices = @transform_1, window_bounds = array<i64: 4, 64>}, {pipeline_mode = #tpu.pipeline_mode<synchronous>, transform_indices = @transform_2, window_bounds = array<i64: 4, 1>}, {pipeline_mode = #tpu.pipeline_mode<synchronous>, transform_indices = @transform_3, window_bounds = array<i64: 64, 4>}, {pipeline_mode = #tpu.pipeline_mode<synchronous>, transform_indices = @transform_4, window_bounds = array<i64: 64, 1>}, {transform_indices = @transform_5, window_bounds = array<i64: 2, 64, 256>}]} {
    %c0 = arith.constant 0 : index
    %c0_0 = arith.constant 0 : index
    %0 = vector.load %arg2[%c0, %c0_0] : memref<4x64xf32, #tpu.memory_space<vmem>>, vector<4x64xf32>
    %c0_1 = arith.constant 0 : index
    %c0_2 = arith.constant 0 : index
    %1 = vector.load %arg3[%c0_1, %c0_2] : memref<4x1xf32, #tpu.memory_space<vmem>>, vector<4x1xf32>
    %c0_3 = arith.constant 0 : index
    %c0_4 = arith.constant 0 : index
    %2 = vector.load %arg4[%c0_3, %c0_4] : memref<64x4xf32, #tpu.memory_space<vmem>>, vector<64x4xf32>
    %c0_5 = arith.constant 0 : index
    %c0_6 = arith.constant 0 : index
    %3 = vector.load %arg5[%c0_5, %c0_6] : memref<64x1xf32, #tpu.memory_space<vmem>>, vector<64x1xf32>
    %c0_7 = arith.constant 0 : index
    %c0_8 = arith.constant 0 : index
    %c0_9 = arith.constant 0 : index
    %4 = vector.load %arg1[%c0_7, %c0_8, %c0_9] : memref<2x64x256xf32, #tpu.memory_space<vmem>>, vector<1x64x256xf32>
    %5 = vector.shape_cast %4 : vector<1x64x256xf32> to vector<64x256xf32>
    %cst = arith.constant dense<0.000000e+00> : vector<64xf32>
    %6 = vector.multi_reduction <add>, %5, %cst [1] : vector<64x256xf32> to vector<64xf32>
    %7 = vector.shape_cast %6 : vector<64xf32> to vector<64x1xf32>
    %cst_10 = arith.constant 2.560000e+02 : f32
    %8 = vector.broadcast %cst_10 : f32 to vector<64x1xf32>
    %9 = arith.divf %7, %8 : vector<64x1xf32>
    %cst_11 = arith.constant dense<0.000000e+00> : vector<4x1xf32>
    %10 = tpu.matmul %0, %9, %cst_11 {dimension_numbers = #tpu.dot_dimension_numbers<[1], [0], [0], [1], [0, 0, 1, 1], [], []>} : vector<4x64xf32>, vector<64x1xf32>, vector<4x1xf32> -> vector<4x1xf32>
    %11 = arith.addf %10, %1 : vector<4x1xf32>
    %cst_12 = arith.constant 0.000000e+00 : f32
    %12 = vector.broadcast %cst_12 : f32 to vector<4x1xf32>
    %13 = arith.maximumf %11, %12 : vector<4x1xf32>
    %cst_13 = arith.constant dense<0.000000e+00> : vector<64x1xf32>
    %14 = tpu.matmul %2, %13, %cst_13 {dimension_numbers = #tpu.dot_dimension_numbers<[1], [0], [0], [1], [0, 0, 1, 1], [], []>} : vector<64x4xf32>, vector<4x1xf32>, vector<64x1xf32> -> vector<64x1xf32>
    %15 = arith.addf %14, %3 : vector<64x1xf32>
    %cst_14 = arith.constant 0.000000e+00 : f32
    %16 = vector.broadcast %cst_14 : f32 to vector<64x1xf32>
    %17 = arith.subf %16, %15 : vector<64x1xf32>
    %18 = math.exp %17 : vector<64x1xf32>
    %cst_15 = arith.constant 1.000000e+00 : f32
    %19 = vector.broadcast %cst_15 : f32 to vector<64x1xf32>
    %20 = arith.addf %19, %18 : vector<64x1xf32>
    %21 = tpu.reciprocal %20 {approx = true} : vector<64x1xf32> -> vector<64x1xf32>
    %22 = vector.broadcast %21 : vector<64x1xf32> to vector<64x256xf32>
    %23 = arith.mulf %5, %22 : vector<64x256xf32>
    %c0_16 = arith.constant 0 : index
    %c0_17 = arith.constant 0 : index
    %c0_18 = arith.constant 0 : index
    %24 = vector.load %arg6[%c0_16, %c0_17, %c0_18] : memref<2x64x256xf32, #tpu.memory_space<vmem>>, vector<1x64x256xf32>
    %25 = vector.shape_cast %24 : vector<1x64x256xf32> to vector<64x256xf32>
    %26 = vector.shape_cast %23 : vector<64x256xf32> to vector<1x64x256xf32>
    tpu.vector_store %arg6[%c0_16, %c0_17, %c0_18], %26 {strides = array<i32>} : memref<2x64x256xf32, #tpu.memory_space<vmem>>, vector<1x64x256xf32>,
    %c1 = arith.constant 1 : index
    %c0_19 = arith.constant 0 : index
    %c0_20 = arith.constant 0 : index
    %27 = vector.load %arg1[%c1, %c0_19, %c0_20] : memref<2x64x256xf32, #tpu.memory_space<vmem>>, vector<1x64x256xf32>
    %28 = vector.shape_cast %27 : vector<1x64x256xf32> to vector<64x256xf32>
    %cst_21 = arith.constant dense<0.000000e+00> : vector<64xf32>
    %29 = vector.multi_reduction <add>, %28, %cst_21 [1] : vector<64x256xf32> to vector<64xf32>
    %30 = vector.shape_cast %29 : vector<64xf32> to vector<64x1xf32>
    %cst_22 = arith.constant 2.560000e+02 : f32
    %31 = vector.broadcast %cst_22 : f32 to vector<64x1xf32>
    %32 = arith.divf %30, %31 : vector<64x1xf32>
    %cst_23 = arith.constant dense<0.000000e+00> : vector<4x1xf32>
    %33 = tpu.matmul %0, %32, %cst_23 {dimension_numbers = #tpu.dot_dimension_numbers<[1], [0], [0], [1], [0, 0, 1, 1], [], []>} : vector<4x64xf32>, vector<64x1xf32>, vector<4x1xf32> -> vector<4x1xf32>
    %34 = arith.addf %33, %1 : vector<4x1xf32>
    %cst_24 = arith.constant 0.000000e+00 : f32
    %35 = vector.broadcast %cst_24 : f32 to vector<4x1xf32>
    %36 = arith.maximumf %34, %35 : vector<4x1xf32>
    %cst_25 = arith.constant dense<0.000000e+00> : vector<64x1xf32>
    %37 = tpu.matmul %2, %36, %cst_25 {dimension_numbers = #tpu.dot_dimension_numbers<[1], [0], [0], [1], [0, 0, 1, 1], [], []>} : vector<64x4xf32>, vector<4x1xf32>, vector<64x1xf32> -> vector<64x1xf32>
    %38 = arith.addf %37, %3 : vector<64x1xf32>
    %cst_26 = arith.constant 0.000000e+00 : f32
    %39 = vector.broadcast %cst_26 : f32 to vector<64x1xf32>
    %40 = arith.subf %39, %38 : vector<64x1xf32>
    %41 = math.exp %40 : vector<64x1xf32>
    %cst_27 = arith.constant 1.000000e+00 : f32
    %42 = vector.broadcast %cst_27 : f32 to vector<64x1xf32>
    %43 = arith.addf %42, %41 : vector<64x1xf32>
    %44 = tpu.reciprocal %43 {approx = true} : vector<64x1xf32> -> vector<64x1xf32>
    %45 = vector.broadcast %44 : vector<64x1xf32> to vector<64x256xf32>
    %46 = arith.mulf %28, %45 : vector<64x256xf32>
    %c1_28 = arith.constant 1 : index
    %c0_29 = arith.constant 0 : index
    %c0_30 = arith.constant 0 : index
    %47 = vector.load %arg6[%c1_28, %c0_29, %c0_30] : memref<2x64x256xf32, #tpu.memory_space<vmem>>, vector<1x64x256xf32>
    %48 = vector.shape_cast %47 : vector<1x64x256xf32> to vector<64x256xf32>
    %49 = vector.shape_cast %46 : vector<64x256xf32> to vector<1x64x256xf32>
    tpu.vector_store %arg6[%c1_28, %c0_29, %c0_30], %49 {strides = array<i32>} : memref<2x64x256xf32, #tpu.memory_space<vmem>>, vector<1x64x256xf32>,
    return
  }
  func.func @transform_0(%arg0: i32) -> (i32, i32, i32) {
    %c0_i32 = arith.constant 0 : i32
    %c0_i32_0 = arith.constant 0 : i32
    %c0_i32_1 = arith.constant 0 : i32
    return %arg0, %c0_i32, %c0_i32_0 : i32, i32, i32
  }
  func.func @transform_1(%arg0: i32) -> (i32, i32) {
    %c0_i32 = arith.constant 0 : i32
    %c0_i32_0 = arith.constant 0 : i32
    %c0_i32_1 = arith.constant 0 : i32
    return %c0_i32, %c0_i32_0 : i32, i32
  }
  func.func @transform_2(%arg0: i32) -> (i32, i32) {
    %c0_i32 = arith.constant 0 : i32
    %c0_i32_0 = arith.constant 0 : i32
    %c0_i32_1 = arith.constant 0 : i32
    return %c0_i32, %c0_i32_0 : i32, i32
  }
  func.func @transform_3(%arg0: i32) -> (i32, i32) {
    %c0_i32 = arith.constant 0 : i32
    %c0_i32_0 = arith.constant 0 : i32
    %c0_i32_1 = arith.constant 0 : i32
    return %c0_i32, %c0_i32_0 : i32, i32
  }
  func.func @transform_4(%arg0: i32) -> (i32, i32) {
    %c0_i32 = arith.constant 0 : i32
    %c0_i32_0 = arith.constant 0 : i32
    %c0_i32_1 = arith.constant 0 : i32
    return %c0_i32, %c0_i32_0 : i32, i32
  }
  func.func @transform_5(%arg0: i32) -> (i32, i32, i32) {
    %c0_i32 = arith.constant 0 : i32
    %c0_i32_0 = arith.constant 0 : i32
    %c0_i32_1 = arith.constant 0 : i32
    return %arg0, %c0_i32, %c0_i32_0 : i32, i32, i32
  }
}

</mosaic_0001>

<llo_original>
// kernel: tpu_custom_call.1
$region0: #{tpu_custom_call.1}
  #allocation0 [shape = 'u32[]', space=smem, size = 0x4, offset = 0x4, fixed_abs, tag = 'smem constant byte address 0x4 - core index']
  #allocation1 [shape = 'u32[72,128]{1,0:T(1,128)}', space=vmem, size = 0x9000, scoped, tag = 'internal scratch']
  %s0 = inlined_call_operand.hbm [shape: f32[2,64,256], index: 0, kind: input, shape index: {}]
  %s1 = inlined_call_operand.vmem [shape: f32[4,64], index: 1, kind: input, shape index: {}]
  %s2 = inlined_call_operand.vmem [shape: f32[4,1], index: 2, kind: input, shape index: {}]
  %s3 = inlined_call_operand.vmem [shape: f32[64,4], index: 3, kind: input, shape index: {}]
  %s4 = inlined_call_operand.vmem [shape: f32[64,1], index: 4, kind: input, shape index: {}]
  %s5 = inlined_call_operand.hbm [shape: f32[2,64,256], index: 5, kind: output, shape index: {}]
  %s6 = sld [smem:[#allocation0]]
  $region34: #{tpu_custom_call.1} parent=0
    _
  %s8 = ssub.s32 1, %s6
  %s9 = scalar_select 0, %s8, %s6
  $region1: #{tpu_custom_call.1} parent=0
    #allocation2 [shape = 'u8[131072]{0}', space=vmem, size = 0x20000, scoped, tag = 'input window, operand 0, single buffered']
    #allocation3 [shape = 's32[1]{0}', space=sflag, size = 0x4, scoped, tag = 'scoped memory for tpu_custom_call.1']
    #allocation4 [shape = 's32[1]{0}', space=sflag, size = 0x4, scoped, tag = 'scoped memory for tpu_custom_call.1']
    #allocation5 [shape = 'u8[131072]{0}', space=vmem, size = 0x20000, scoped, tag = 'output window, operand 0, single buffered']
    %10 = vsyncpa [#allocation3], 0
    %11 = vsyncpa [#allocation4], 0
    // Predicated region
    $region2: #{tpu_custom_call.1} parent=1 // pred_check
      _
    $region3: #{tpu_custom_call.1} parent=1 // pred_check_branch
      %13 = sbr.rel (0) target = $region5
    $region4: #{tpu_custom_call.1} parent=1 // pred_region
      %15 = vsyncadd [#allocation3], 0
      %s16 = sshll.u32 %s0, 4
      %s17 = int_to_ptr.hbm [resolvable:$true] %s16
      %s18 = sshll.u32 [#allocation2], 4
      %s19 = int_to_ptr.vmem [resolvable:$true] %s18
      %24 = dma.hbm_to_vmem [thread:$0]  %s17, 4096, %s19, [#allocation3], 256, 256, 16
    $region5: #{tpu_custom_call.1} parent=1 // pred_fallthru
      _
    // Predicated region
    $region6: #{tpu_custom_call.1} parent=1 // pred_check
      _
    $region7: #{tpu_custom_call.1} parent=1 // pred_check_branch
      %26 = sbr.rel (0) target = $region9
    $region8: #{tpu_custom_call.1} parent=1 // pred_region
      _
    $region9: #{tpu_custom_call.1} parent=1 // pred_fallthru
      _
    // Predicated region
    $region10: #{tpu_custom_call.1} parent=1 // pred_check
      _
    $region11: #{tpu_custom_call.1} parent=1 // pred_check_branch
      %28 = sbr.rel (0) target = $region13
    $region12: #{tpu_custom_call.1} parent=1 // pred_region
      _
    $region13: #{tpu_custom_call.1} parent=1 // pred_fallthru
      _
    // Predicated region
    $region14: #{tpu_custom_call.1} parent=1 // pred_check
      _
    $region15: #{tpu_custom_call.1} parent=1 // pred_check_branch
      %30 = sbr.rel (0) target = $region17
    $region16: #{tpu_custom_call.1} parent=1 // pred_region
      _
    $region17: #{tpu_custom_call.1} parent=1 // pred_fallthru
      _
    // Predicated region
    $region18: #{tpu_custom_call.1} parent=1 // pred_check
      _
    $region19: #{tpu_custom_call.1} parent=1 // pred_check_branch
      %32 = sbr.rel (0) target = $region21
    $region20: #{tpu_custom_call.1} parent=1 // pred_region
      _
    $region21: #{tpu_custom_call.1} parent=1 // pred_fallthru
      _
    // Predicated region
    $region22: #{tpu_custom_call.1} parent=1 // pred_check
      _
    $region23: #{tpu_custom_call.1} parent=1 // pred_check_branch
      %34 = sbr.rel (0) target = $region25
    $region24: #{tpu_custom_call.1} parent=1 // pred_region
      %36 = dma.done [#allocation3], 4096
    $region25: #{tpu_custom_call.1} parent=1 // pred_fallthru
      _
    %v37 = vld [vmem:[%s1] sm:$0xf]
    %v38 = vld [vmem:[%s2] sm:$0xf]
    %v39 = vld [vmem:[%s3] sm:$0xff]
    %v40 = vld [vmem:[%s3 + $0x8] sm:$0xff]
    %v41 = vld [vmem:[%s3 + $0x10] sm:$0xff]
    %v42 = vld [vmem:[%s3 + $0x18] sm:$0xff]
    %v43 = vld [vmem:[%s3 + $0x20] sm:$0xff]
    %v44 = vld [vmem:[%s3 + $0x28] sm:$0xff]
    %v45 = vld [vmem:[%s3 + $0x30] sm:$0xff]
    %v46 = vld [vmem:[%s3 + $0x38] sm:$0xff]
    %v47 = vld [vmem:[%s4] sm:$0xff]
    %v48 = vld [vmem:[%s4 + $0x8] sm:$0xff]
    %v49 = vld [vmem:[%s4 + $0x10] sm:$0xff]
    %v50 = vld [vmem:[%s4 + $0x18] sm:$0xff]
    %v51 = vld [vmem:[%s4 + $0x20] sm:$0xff]
    %v52 = vld [vmem:[%s4 + $0x28] sm:$0xff]
    %v53 = vld [vmem:[%s4 + $0x30] sm:$0xff]
    %v54 = vld [vmem:[%s4 + $0x38] sm:$0xff]
    %v55 = vld [vmem:[#allocation2] sm:$0xff]
    %v56 = vld [vmem:[#allocation2 + $0x8] sm:$0xff]
    %v57 = vld [vmem:[#allocation2 + $0x10] sm:$0xff]
    %v58 = vld [vmem:[#allocation2 + $0x18] sm:$0xff]
    %v59 = vld [vmem:[#allocation2 + $0x20] sm:$0xff]
    %v60 = vld [vmem:[#allocation2 + $0x28] sm:$0xff]
    %v61 = vld [vmem:[#allocation2 + $0x30] sm:$0xff]
    %v62 = vld [vmem:[#allocation2 + $0x38] sm:$0xff]
    %v63 = vld [vmem:[#allocation2 + $0x40] sm:$0xff]
    %v64 = vld [vmem:[#allocation2 + $0x48] sm:$0xff]
    %v65 = vld [vmem:[#allocation2 + $0x50] sm:$0xff]
    %v66 = vld [vmem:[#allocation2 + $0x58] sm:$0xff]
    %v67 = vld [vmem:[#allocation2 + $0x60] sm:$0xff]
    %v68 = vld [vmem:[#allocation2 + $0x68] sm:$0xff]
    %v69 = vld [vmem:[#allocation2 + $0x70] sm:$0xff]
    %v70 = vld [vmem:[#allocation2 + $0x78] sm:$0xff]
    %v71 = vadd.f32 %v55, %v56
    %72 = vadd.xlane.f32.xlu0 %v71
    %v73 = vpop.xlane.xlu0 %72
    %v74 = vadd.f32 %v57, %v58
    %75 = vadd.xlane.f32.xlu0 %v74
    %v76 = vpop.xlane.xlu0 %75
    %v77 = vadd.f32 %v59, %v60
    %78 = vadd.xlane.f32.xlu0 %v77
    %v79 = vpop.xlane.xlu0 %78
    %v80 = vadd.f32 %v61, %v62
    %81 = vadd.xlane.f32.xlu0 %v80
    %v82 = vpop.xlane.xlu0 %81
    %v83 = vadd.f32 %v63, %v64
    %84 = vadd.xlane.f32.xlu0 %v83
    %v85 = vpop.xlane.xlu0 %84
    %v86 = vadd.f32 %v65, %v66
    %87 = vadd.xlane.f32.xlu0 %v86
    %v88 = vpop.xlane.xlu0 %87
    %v89 = vadd.f32 %v67, %v68
    %90 = vadd.xlane.f32.xlu0 %v89
    %v91 = vpop.xlane.xlu0 %90
    %v92 = vadd.f32 %v69, %v70
    %93 = vadd.xlane.f32.xlu0 %v92
    %v94 = vpop.xlane.xlu0 %93
    %v95 = vrcp.pop 256.0
    %v96 = vmul.f32 256.0, %v95
    %v97 = vsub.f32 1.0, %v96
    %v98 = vmul.f32 %v95, %v97
    %v99 = vadd.f32 %v95, %v98
    %vm100 = vweird.f32 %v95
    %v101 = vsel %vm100, %v95, %v99
    %v102 = vmul.f32 %v73, %v101
    %v103 = vmul.f32 %v76, %v101
    %v104 = vmul.f32 %v79, %v101
    %v105 = vmul.f32 %v82, %v101
    %v106 = vmul.f32 %v85, %v101
    %v107 = vmul.f32 %v88, %v101
    %v108 = vmul.f32 %v91, %v101
    %v109 = vmul.f32 %v94, %v101
    %vm110 = vcmask 523264
    %v112 = vsel %vm110, %v37, 0
    %114 = vmatpush.msra.mxu0 0.0
    %115 = vmatpush.msra.mxu0 0.0
    %116 = vmatpush.msra.mxu0 0.0
    %117 = vmatpush.msra.mxu0 0.0
    %118 = vmatpush.msra.mxu0 0.0
    %119 = vmatpush.msra.mxu0 0.0
    %120 = vmatpush.msra.mxu0 0.0
    %121 = vmatpush.msra.mxu0 0.0
    %122 = vmatpush.msra.mxu0 %v109
    %123 = vmatpush.msra.mxu0 %v108
    %124 = vmatpush.msra.mxu0 %v107
    %125 = vmatpush.msra.mxu0 %v106
    %126 = vmatpush.msra.mxu0 %v105
    %127 = vmatpush.msra.mxu0 %v104
    %128 = vmatpush.msra.mxu0 %v103
    %129 = vmatpush.msra.mxu0 %v102
    %130 = vmatmul.f32.gmra.mxu0 %v112
    %v131 = vpop.f32.mrf.mxu0
    %v132 = vadd.f32 %v38, %v131
    %133 = vdwg.mxu0
    %v134 = vmax.f32 %v132, 0.0
    %vm135 = vcmask 31744
    %v137 = vsel %vm135, %v39, 0
    %v140 = vsel %vm135, %v40, 0
    %v143 = vsel %vm135, %v41, 0
    %v146 = vsel %vm135, %v42, 0
    %v149 = vsel %vm135, %v43, 0
    %v152 = vsel %vm135, %v44, 0
    %v155 = vsel %vm135, %v45, 0
    %v158 = vsel %vm135, %v46, 0
    %vm160 = vcmask 1043456
    %v162 = vsel %vm160, %v134, 0
    %164 = vmatpush.msra.mxu0 0.0
    %165 = vmatpush.msra.mxu0 0.0
    %166 = vmatpush.msra.mxu0 0.0
    %167 = vmatpush.msra.mxu0 0.0
    %168 = vmatpush.msra.mxu0 0.0
    %169 = vmatpush.msra.mxu0 0.0
    %170 = vmatpush.msra.mxu0 0.0
    %171 = vmatpush.msra.mxu0 0.0
    %172 = vmatpush.msra.mxu0 0.0
    %173 = vmatpush.msra.mxu0 0.0
    %174 = vmatpush.msra.mxu0 0.0
    %175 = vmatpush.msra.mxu0 0.0
    %176 = vmatpush.msra.mxu0 0.0
    %177 = vmatpush.msra.mxu0 0.0
    %178 = vmatpush.msra.mxu0 0.0
    %179 = vmatpush.msra.mxu0 %v162
    %180 = vmatmul.f32.gmra.mxu0 %v137
    %v181 = vpop.f32.mrf.mxu0
    %v182 = vadd.f32 %v47, %v181
    %183 = vmatmul.f32.gmra.mxu0 %v140
    %v184 = vpop.f32.mrf.mxu0
    %v185 = vadd.f32 %v48, %v184
    %186 = vmatmul.f32.gmra.mxu0 %v143
    %v187 = vpop.f32.mrf.mxu0
    %v188 = vadd.f32 %v49, %v187
    %189 = vmatmul.f32.gmra.mxu0 %v146
    %v190 = vpop.f32.mrf.mxu0
    %v191 = vadd.f32 %v50, %v190
    %192 = vmatmul.f32.gmra.mxu0 %v149
    %v193 = vpop.f32.mrf.mxu0
    %v194 = vadd.f32 %v51, %v193
    %195 = vmatmul.f32.gmra.mxu0 %v152
    %v196 = vpop.f32.mrf.mxu0
    %v197 = vadd.f32 %v52, %v196
    %198 = vmatmul.f32.gmra.mxu0 %v155
    %v199 = vpop.f32.mrf.mxu0
    %v200 = vadd.f32 %v53, %v199
    %201 = vmatmul.f32.gmra.mxu0 %v158
    %v202 = vpop.f32.mrf.mxu0
    %v203 = vadd.f32 %v54, %v202
    %204 = vdwg.mxu0
    %v205 = vsub.f32 0.0, %v182
    %v206 = vsub.f32 0.0, %v185
    %v207 = vsub.f32 0.0, %v188
    %v208 = vsub.f32 0.0, %v191
    %v209 = vsub.f32 0.0, %v194
    %v210 = vsub.f32 0.0, %v197
    %v211 = vsub.f32 0.0, %v200
    %v212 = vsub.f32 0.0, %v203
    %v213 = vmul.f32 %v205, 1.442695
    %v214 = vpow.pop %v213
    %v215 = vmul.f32 %v206, 1.442695
    %v216 = vpow.pop %v215
    %v217 = vmul.f32 %v207, 1.442695
    %v218 = vpow.pop %v217
    %v219 = vmul.f32 %v208, 1.442695
    %v220 = vpow.pop %v219
    %v221 = vmul.f32 %v209, 1.442695
    %v222 = vpow.pop %v221
    %v223 = vmul.f32 %v210, 1.442695
    %v224 = vpow.pop %v223
    %v225 = vmul.f32 %v211, 1.442695
    %v226 = vpow.pop %v225
    %v227 = vmul.f32 %v212, 1.442695
    %v228 = vpow.pop %v227
    %v229 = vadd.f32 %v214, 1.0
    %v230 = vadd.f32 %v216, 1.0
    %v231 = vadd.f32 %v218, 1.0
    %v232 = vadd.f32 %v220, 1.0
    %v233 = vadd.f32 %v222, 1.0
    %v234 = vadd.f32 %v224, 1.0
    %v235 = vadd.f32 %v226, 1.0
    %v236 = vadd.f32 %v228, 1.0
    %v237 = vrcp.pop %v229
    %v238 = vrcp.pop %v230
    %v239 = vrcp.pop %v231
    %v240 = vrcp.pop %v232
    %v241 = vrcp.pop %v233
    %v242 = vrcp.pop %v234
    %v243 = vrcp.pop %v235
    %v244 = vrcp.pop %v236
    %246 = vset.pattern.permute.xlu0 0
    %247 = vperm.xlu0 %246, %v237
    %v248 = vpop.permute.xlu0 %247
    %251 = vset.pattern.permute.xlu0 0
    %252 = vperm.xlu0 %251, %v238
    %v253 = vpop.permute.xlu0 %252
    %256 = vset.pattern.permute.xlu0 0
    %257 = vperm.xlu0 %256, %v239
    %v258 = vpop.permute.xlu0 %257
    %261 = vset.pattern.permute.xlu0 0
    %262 = vperm.xlu0 %261, %v240
    %v263 = vpop.permute.xlu0 %262
    %266 = vset.pattern.permute.xlu0 0
    %267 = vperm.xlu0 %266, %v241
    %v268 = vpop.permute.xlu0 %267
    %271 = vset.pattern.permute.xlu0 0
    %272 = vperm.xlu0 %271, %v242
    %v273 = vpop.permute.xlu0 %272
    %276 = vset.pattern.permute.xlu0 0
    %277 = vperm.xlu0 %276, %v243
    %v278 = vpop.permute.xlu0 %277
    %281 = vset.pattern.permute.xlu0 0
    %282 = vperm.xlu0 %281, %v244
    %v283 = vpop.permute.xlu0 %282
    %v285 = vmul.f32 %v55, %v248
    %v286 = vmul.f32 %v56, %v248
    %v287 = vmul.f32 %v57, %v253
    %v288 = vmul.f32 %v58, %v253
    %v289 = vmul.f32 %v59, %v258
    %v290 = vmul.f32 %v60, %v258
    %v291 = vmul.f32 %v61, %v263
    %v292 = vmul.f32 %v62, %v263
    %v293 = vmul.f32 %v63, %v268
    %v294 = vmul.f32 %v64, %v268
    %v295 = vmul.f32 %v65, %v273
    %v296 = vmul.f32 %v66, %v273
    %v297 = vmul.f32 %v67, %v278
    %v298 = vmul.f32 %v68, %v278
    %v299 = vmul.f32 %v69, %v283
    %v300 = vmul.f32 %v70, %v283
    %301 = vst [vmem:[#allocation5] sm:$0xff] %v285
    %302 = vst [vmem:[#allocation5 + $0x8] sm:$0xff] %v286
    %303 = vst [vmem:[#allocation5 + $0x10] sm:$0xff] %v287
    %304 = vst [vmem:[#allocation5 + $0x18] sm:$0xff] %v288
    %305 = vst [vmem:[#allocation5 + $0x20] sm:$0xff] %v289
    %306 = vst [vmem:[#allocation5 + $0x28] sm:$0xff] %v290
    %307 = vst [vmem:[#allocation5 + $0x30] sm:$0xff] %v291
    %308 = vst [vmem:[#allocation5 + $0x38] sm:$0xff] %v292
    %309 = vst [vmem:[#allocation5 + $0x40] sm:$0xff] %v293
    %310 = vst [vmem:[#allocation5 + $0x48] sm:$0xff] %v294
    %311 = vst [vmem:[#allocation5 + $0x50] sm:$0xff] %v295
    %312 = vst [vmem:[#allocation5 + $0x58] sm:$0xff] %v296
    %313 = vst [vmem:[#allocation5 + $0x60] sm:$0xff] %v297
    %314 = vst [vmem:[#allocation5 + $0x68] sm:$0xff] %v298
    %315 = vst [vmem:[#allocation5 + $0x70] sm:$0xff] %v299
    %316 = vst [vmem:[#allocation5 + $0x78] sm:$0xff] %v300
    %s317 = scalar_lea.vmem [#allocation2], 128
    %v318 = vld [vmem:[%s317] sm:$0xff]
    %v319 = vld [vmem:[%s317 + $0x8] sm:$0xff]
    %v320 = vld [vmem:[%s317 + $0x10] sm:$0xff]
    %v321 = vld [vmem:[%s317 + $0x18] sm:$0xff]
    %v322 = vld [vmem:[%s317 + $0x20] sm:$0xff]
    %v323 = vld [vmem:[%s317 + $0x28] sm:$0xff]
    %v324 = vld [vmem:[%s317 + $0x30] sm:$0xff]
    %v325 = vld [vmem:[%s317 + $0x38] sm:$0xff]
    %v326 = vld [vmem:[%s317 + $0x40] sm:$0xff]
    %v327 = vld [vmem:[%s317 + $0x48] sm:$0xff]
    %v328 = vld [vmem:[%s317 + $0x50] sm:$0xff]
    %v329 = vld [vmem:[%s317 + $0x58] sm:$0xff]
    %v330 = vld [vmem:[%s317 + $0x60] sm:$0xff]
    %v331 = vld [vmem:[%s317 + $0x68] sm:$0xff]
    %v332 = vld [vmem:[%s317 + $0x70] sm:$0xff]
    %v333 = vld [vmem:[%s317 + $0x78] sm:$0xff]
    %v334 = vadd.f32 %v318, %v319
    %335 = vadd.xlane.f32.xlu0 %v334
    %v336 = vpop.xlane.xlu0 %335
    %v337 = vadd.f32 %v320, %v321
    %338 = vadd.xlane.f32.xlu0 %v337
    %v339 = vpop.xlane.xlu0 %338
    %v340 = vadd.f32 %v322, %v323
    %341 = vadd.xlane.f32.xlu0 %v340
    %v342 = vpop.xlane.xlu0 %341
    %v343 = vadd.f32 %v324, %v325
    %344 = vadd.xlane.f32.xlu0 %v343
    %v345 = vpop.xlane.xlu0 %344
    %v346 = vadd.f32 %v326, %v327
    %347 = vadd.xlane.f32.xlu0 %v346
    %v348 = vpop.xlane.xlu0 %347
    %v349 = vadd.f32 %v328, %v329
    %350 = vadd.xlane.f32.xlu0 %v349
    %v351 = vpop.xlane.xlu0 %350
    %v352 = vadd.f32 %v330, %v331
    %353 = vadd.xlane.f32.xlu0 %v352
    %v354 = vpop.xlane.xlu0 %353
    %v355 = vadd.f32 %v332, %v333
    %356 = vadd.xlane.f32.xlu0 %v355
    %v357 = vpop.xlane.xlu0 %356
    %v358 = vmul.f32 %v336, %v101
    %v359 = vmul.f32 %v339, %v101
    %v360 = vmul.f32 %v342, %v101
    %v361 = vmul.f32 %v345, %v101
    %v362 = vmul.f32 %v348, %v101
    %v363 = vmul.f32 %v351, %v101
    %v364 = vmul.f32 %v354, %v101
    %v365 = vmul.f32 %v357, %v101
    %366 = vmatpush.msra.mxu0 0.0
    %367 = vmatpush.msra.mxu0 0.0
    %368 = vmatpush.msra.mxu0 0.0
    %369 = vmatpush.msra.mxu0 0.0
    %370 = vmatpush.msra.mxu0 0.0
    %371 = vmatpush.msra.mxu0 0.0
    %372 = vmatpush.msra.mxu0 0.0
    %373 = vmatpush.msra.mxu0 0.0
    %374 = vmatpush.msra.mxu0 %v365
    %375 = vmatpush.msra.mxu0 %v364
    %376 = vmatpush.msra.mxu0 %v363
    %377 = vmatpush.msra.mxu0 %v362
    %378 = vmatpush.msra.mxu0 %v361
    %379 = vmatpush.msra.mxu0 %v360
    %380 = vmatpush.msra.mxu0 %v359
    %381 = vmatpush.msra.mxu0 %v358
    %382 = vmatmul.f32.gmra.mxu0 %v112
    %v383 = vpop.f32.mrf.mxu0
    %v384 = vadd.f32 %v38, %v383
    %385 = vdwg.mxu0
    %v386 = vmax.f32 %v384, 0.0
    %v388 = vsel %vm160, %v386, 0
    %390 = vmatpush.msra.mxu0 0.0
    %391 = vmatpush.msra.mxu0 0.0
    %392 = vmatpush.msra.mxu0 0.0
    %393 = vmatpush.msra.mxu0 0.0
    %394 = vmatpush.msra.mxu0 0.0
    %395 = vmatpush.msra.mxu0 0.0
    %396 = vmatpush.msra.mxu0 0.0
    %397 = vmatpush.msra.mxu0 0.0
    %398 = vmatpush.msra.mxu0 0.0
    %399 = vmatpush.msra.mxu0 0.0
    %400 = vmatpush.msra.mxu0 0.0
    %401 = vmatpush.msra.mxu0 0.0
    %402 = vmatpush.msra.mxu0 0.0
    %403 = vmatpush.msra.mxu0 0.0
    %404 = vmatpush.msra.mxu0 0.0
    %405 = vmatpush.msra.mxu0 %v388
    %406 = vmatmul.f32.gmra.mxu0 %v137
    %v407 = vpop.f32.mrf.mxu0
    %v408 = vadd.f32 %v47, %v407
    %409 = vmatmul.f32.gmra.mxu0 %v140
    %v410 = vpop.f32.mrf.mxu0
    %v411 = vadd.f32 %v48, %v410
    %412 = vmatmul.f32.gmra.mxu0 %v143
    %v413 = vpop.f32.mrf.mxu0
    %v414 = vadd.f32 %v49, %v413
    %415 = vmatmul.f32.gmra.mxu0 %v146
    %v416 = vpop.f32.mrf.mxu0
    %v417 = vadd.f32 %v50, %v416
    %418 = vmatmul.f32.gmra.mxu0 %v149
    %v419 = vpop.f32.mrf.mxu0
    %v420 = vadd.f32 %v51, %v419
    %421 = vmatmul.f32.gmra.mxu0 %v152
    %v422 = vpop.f32.mrf.mxu0
    %v423 = vadd.f32 %v52, %v422
    %424 = vmatmul.f32.gmra.mxu0 %v155
    %v425 = vpop.f32.mrf.mxu0
    %v426 = vadd.f32 %v53, %v425
    %427 = vmatmul.f32.gmra.mxu0 %v158
    %v428 = vpop.f32.mrf.mxu0
    %v429 = vadd.f32 %v54, %v428
    %430 = vdwg.mxu0
    %v431 = vsub.f32 0.0, %v408
    %v432 = vsub.f32 0.0, %v411
    %v433 = vsub.f32 0.0, %v414
    %v434 = vsub.f32 0.0, %v417
    %v435 = vsub.f32 0.0, %v420
    %v436 = vsub.f32 0.0, %v423
    %v437 = vsub.f32 0.0, %v426
    %v438 = vsub.f32 0.0, %v429
    %v439 = vmul.f32 %v431, 1.442695
    %v440 = vpow.pop %v439
    %v441 = vmul.f32 %v432, 1.442695
    %v442 = vpow.pop %v441
    %v443 = vmul.f32 %v433, 1.442695
    %v444 = vpow.pop %v443
    %v445 = vmul.f32 %v434, 1.442695
    %v446 = vpow.pop %v445
    %v447 = vmul.f32 %v435, 1.442695
    %v448 = vpow.pop %v447
    %v449 = vmul.f32 %v436, 1.442695
    %v450 = vpow.pop %v449
    %v451 = vmul.f32 %v437, 1.442695
    %v452 = vpow.pop %v451
    %v453 = vmul.f32 %v438, 1.442695
    %v454 = vpow.pop %v453
    %v455 = vadd.f32 %v440, 1.0
    %v456 = vadd.f32 %v442, 1.0
    %v457 = vadd.f32 %v444, 1.0
    %v458 = vadd.f32 %v446, 1.0
    %v459 = vadd.f32 %v448, 1.0
    %v460 = vadd.f32 %v450, 1.0
    %v461 = vadd.f32 %v452, 1.0
    %v462 = vadd.f32 %v454, 1.0
    %v463 = vrcp.pop %v455
    %v464 = vrcp.pop %v456
    %v465 = vrcp.pop %v457
    %v466 = vrcp.pop %v458
    %v467 = vrcp.pop %v459
    %v468 = vrcp.pop %v460
    %v469 = vrcp.pop %v461
    %v470 = vrcp.pop %v462
    %472 = vset.pattern.permute.xlu0 0
    %473 = vperm.xlu0 %472, %v463
    %v474 = vpop.permute.xlu0 %473
    %477 = vset.pattern.permute.xlu0 0
    %478 = vperm.xlu0 %477, %v464
    %v479 = vpop.permute.xlu0 %478
    %482 = vset.pattern.permute.xlu0 0
    %483 = vperm.xlu0 %482, %v465
    %v484 = vpop.permute.xlu0 %483
    %487 = vset.pattern.permute.xlu0 0
    %488 = vperm.xlu0 %487, %v466
    %v489 = vpop.permute.xlu0 %488
    %492 = vset.pattern.permute.xlu0 0
    %493 = vperm.xlu0 %492, %v467
    %v494 = vpop.permute.xlu0 %493
    %497 = vset.pattern.permute.xlu0 0
    %498 = vperm.xlu0 %497, %v468
    %v499 = vpop.permute.xlu0 %498
    %502 = vset.pattern.permute.xlu0 0
    %503 = vperm.xlu0 %502, %v469
    %v504 = vpop.permute.xlu0 %503
    %507 = vset.pattern.permute.xlu0 0
    %508 = vperm.xlu0 %507, %v470
    %v509 = vpop.permute.xlu0 %508
    %v511 = vmul.f32 %v318, %v474
    %v512 = vmul.f32 %v319, %v474
    %v513 = vmul.f32 %v320, %v479
    %v514 = vmul.f32 %v321, %v479
    %v515 = vmul.f32 %v322, %v484
    %v516 = vmul.f32 %v323, %v484
    %v517 = vmul.f32 %v324, %v489
    %v518 = vmul.f32 %v325, %v489
    %v519 = vmul.f32 %v326, %v494
    %v520 = vmul.f32 %v327, %v494
    %v521 = vmul.f32 %v328, %v499
    %v522 = vmul.f32 %v329, %v499
    %v523 = vmul.f32 %v330, %v504
    %v524 = vmul.f32 %v331, %v504
    %v525 = vmul.f32 %v332, %v509
    %v526 = vmul.f32 %v333, %v509
    %s527 = scalar_lea.vmem [#allocation5], 128
    %528 = vst [vmem:[%s527] sm:$0xff] %v511
    %529 = vst [vmem:[%s527 + $0x8] sm:$0xff] %v512
    %530 = vst [vmem:[%s527 + $0x10] sm:$0xff] %v513
    %531 = vst [vmem:[%s527 + $0x18] sm:$0xff] %v514
    %532 = vst [vmem:[%s527 + $0x20] sm:$0xff] %v515
    %533 = vst [vmem:[%s527 + $0x28] sm:$0xff] %v516
    %534 = vst [vmem:[%s527 + $0x30] sm:$0xff] %v517
    %535 = vst [vmem:[%s527 + $0x38] sm:$0xff] %v518
    %536 = vst [vmem:[%s527 + $0x40] sm:$0xff] %v519
    %537 = vst [vmem:[%s527 + $0x48] sm:$0xff] %v520
    %538 = vst [vmem:[%s527 + $0x50] sm:$0xff] %v521
    %539 = vst [vmem:[%s527 + $0x58] sm:$0xff] %v522
    %540 = vst [vmem:[%s527 + $0x60] sm:$0xff] %v523
    %541 = vst [vmem:[%s527 + $0x68] sm:$0xff] %v524
    %542 = vst [vmem:[%s527 + $0x70] sm:$0xff] %v525
    %543 = vst [vmem:[%s527 + $0x78] sm:$0xff] %v526
    // Predicated region
    $region26: #{tpu_custom_call.1} parent=1 // pred_check
      _
    $region27: #{tpu_custom_call.1} parent=1 // pred_check_branch
      %545 = sbr.rel (0) target = $region29
    $region28: #{tpu_custom_call.1} parent=1 // pred_region
      %547 = vsyncadd [#allocation4], 0
      %s548 = sshll.u32 [#allocation5], 4
      %s549 = int_to_ptr.vmem [resolvable:$true] %s548
      %s550 = sshll.u32 %s5, 4
      %s551 = int_to_ptr.hbm [resolvable:$true] %s550
      %556 = dma.vmem_to_hbm [thread:$0]  %s549, 4096, %s551, [#allocation4], 256, 256, 16
    $region29: #{tpu_custom_call.1} parent=1 // pred_fallthru
      _
    // Predicated region
    $region30: #{tpu_custom_call.1} parent=1 // pred_check
      _
    $region31: #{tpu_custom_call.1} parent=1 // pred_check_branch
      %558 = sbr.rel (0) target = $region33
    $region32: #{tpu_custom_call.1} parent=1 // pred_region
      %560 = dma.done [#allocation4], 4096
    $region33: #{tpu_custom_call.1} parent=1 // pred_fallthru
      _
    %561 = vsyncpa [#allocation3], 1
    %562 = vsyncpa [#allocation4], 1

</llo_original>
